<compile_context>
chip_gen: v5e
topology: v5e:2x2
jax: 0.10.0
libtpu: 0.0.40
codegen_flags: <defaults>
</compile_context>

<pallas_src>
import functools
import math

import jax
import jax.numpy as jnp
from jax.experimental import pallas as pl
from jax.experimental.pallas import tpu as pltpu


def _layernorm_kernel(x_ref, ab_ref, o_ref, *, eps: float, features: int):
    # x_ref: (tm, features), ab_ref: (2, features) [row 0 = a_2, row 1 = b_2],
    # o_ref: (tm, features).  No lane padding: the block's feature dim equals
    # the full array dim, so reductions see exactly `features` valid lanes.
    x = x_ref[...].astype(jnp.float32)

    # Two-pass mean / squared-deviation (matches torch exactly).
    mean = jnp.sum(x, axis=-1, keepdims=True) * jnp.float32(1.0 / features)
    d = x - mean

    # torch.std uses Bessel's correction (divide by N-1).
    # TODO(synk): features == 1 yields NaN (0/0), same as torch.std(ddof=1).
    if features > 1:
        inv_nm1 = jnp.float32(1.0 / (features - 1))
    else:
        inv_nm1 = jnp.float32(float("nan"))
    var = jnp.sum(d * d, axis=-1, keepdims=True) * inv_nm1
    std = jnp.sqrt(var)

    # 1/(std + eps): EUP approximate reciprocal + one Newton step -> full f32
    # precision while keeping the divide off the VALU slots.
    t = std + jnp.float32(eps)
    inv = pl.reciprocal(t, approx=True)
    inv = inv * (jnp.float32(2.0) - t * inv)

    a = ab_ref[0:1, :].astype(jnp.float32)
    b = ab_ref[1:2, :].astype(jnp.float32)
    y = a * (d * inv) + b
    o_ref[...] = y.astype(o_ref.dtype)


def _native_sublane(itemsize: int) -> int:
    # Packed-sublane multiple per element width: f32 -> 8, bf16 -> 16, int8/fp8 -> 32.
    return {4: 8, 2: 16, 1: 32}.get(itemsize, 8)


def _vmem_budget():
    """Generation-aware (working-set budget, vmem_limit_bytes)."""
    cap = 64 * 1024 * 1024  # conservative default (v7x per-TC VMEM)
    try:
        info = pltpu.get_tpu_info()
        cap = int(getattr(info, "vmem_capacity_bytes", cap))
    except Exception:
        pass
    if cap >= 96 * 1024 * 1024:
        # v5e / v6e: 128 MiB physical — larger tiles, fewer grid steps.
        return 40 * 1024 * 1024, 96 * 1024 * 1024
    # v7x: 64 MiB physical — keep the double-buffered working set well inside it.
    return 24 * 1024 * 1024, 48 * 1024 * 1024


def _pick_row_tile(rows: int, features: int, in_bytes: int, out_bytes: int,
                   sublane: int, budget_bytes: int, max_rows: int = 1024) -> int:
    """Largest sublane-multiple row tile whose pipelined working set fits the budget.

    Per row of a grid step we hold:
      * double-buffered input + output tiles in their storage dtype, and
      * ~3 f32 temporaries from the in-kernel upcast (x, d, y).
    """
    per_row = features * (2 * (in_bytes + out_bytes) + 3 * 4)
    tm = min(budget_bytes // per_row, max_rows)
    # Guarantee >= 2 grid steps whenever there is more than one sublane group
    # of rows, so the "parallel" axis can be sharded across both TensorCores
    # on v7x (harmless single extra step on single-TC v5e/v6e).
    if rows > sublane:
        tm = min(tm, pl.cdiv(rows, 2))
    tm = max((tm // sublane) * sublane, sublane)
    # No point making the tile taller than the sublane-rounded row count.
    tm = min(tm, pl.cdiv(rows, sublane) * sublane)
    return max(tm, sublane)


def layer_norm_pallas(x, a_2, b_2, eps=1e-6, *, max_row_tile=1024):
    """LayerNorm over the last axis of x (matches the PyTorch module's forward).

    x:   (..., features)
    a_2: (features,)  scale
    b_2: (features,)  shift
    """
    orig_shape = x.shape
    features = int(orig_shape[-1])
    rows = int(math.prod(orig_shape[:-1])) if len(orig_shape) > 1 else 1

    x2 = x.reshape(rows, features)
    # Fuse scale/shift into one (2, features) operand: a single small DMA per step.
    ab = jnp.stack([a_2.reshape(-1), b_2.reshape(-1)], axis=0)

    in_bytes = x2.dtype.itemsize
    out_bytes = x.dtype.itemsize
    sublane = _native_sublane(in_bytes)
    budget_bytes, vmem_limit = _vmem_budget()

    tm = _pick_row_tile(rows, features, in_bytes, out_bytes, sublane,
                        budget_bytes, max_rows=max_row_tile)
    grid_steps = pl.cdiv(rows, tm)
    grid = (grid_steps,)

    kernel = functools.partial(_layernorm_kernel, eps=float(eps), features=features)

    # Advisory cost: memory-bound elementwise-with-row-reduction op.  Reflects
    # the bytes actually DMA'd (unpadded input + output + per-step param fetch).
    cost = pl.CostEstimate(
        flops=7 * rows * features,
        transcendentals=2 * rows,  # sqrt + reciprocal per row
        bytes_accessed=rows * features * (in_bytes + out_bytes)
        + grid_steps * 2 * features * ab.dtype.itemsize,
    )

    out = pl.pallas_call(
        kernel,
        out_shape=jax.ShapeDtypeStruct((rows, features), x.dtype),
        grid_spec=pltpu.PrefetchScalarGridSpec(
            num_scalar_prefetch=0,
            grid=grid,
            in_specs=[
                # Last block dim equals the full array dim -> exempt from the
                # 128-divisibility rule; no HBM-side padding needed.
                pl.BlockSpec((tm, features), lambda i: (i, 0)),
                pl.BlockSpec((2, features), lambda i: (0, 0)),
            ],
            out_specs=pl.BlockSpec((tm, features), lambda i: (i, 0)),
        ),
        compiler_params=pltpu.CompilerParams(
            dimension_semantics=("parallel",),
            vmem_limit_bytes=vmem_limit,
        ),
        cost_estimate=cost,
    )(x2, ab)

    return out.reshape(orig_shape)


def layer_norm_ref(x, a_2, b_2, eps=1e-6):
    """Pure-JAX reference matching the PyTorch forward exactly."""
    x32 = x.astype(jnp.float32)
    mean = jnp.mean(x32, axis=-1, keepdims=True)
    d = x32 - mean
    n = x.shape[-1]
    std = jnp.sqrt(jnp.sum(d * d, axis=-1, keepdims=True) / (n - 1))
    return (a_2 * d / (std + eps) + b_2).astype(x.dtype)


if __name__ == "__main__":
    key = jax.random.PRNGKey(0)
    batch, seq, hidden = 2, 8, 32

    x = jax.random.normal(key, (batch, seq, hidden), dtype=jnp.float32)

    # Deterministic parameter init, matching nn.Parameter(torch.ones/zeros(features)).
    a_2 = jnp.ones((hidden,), dtype=jnp.float32)
    b_2 = jnp.zeros((hidden,), dtype=jnp.float32)

    out = layer_norm_pallas(x, a_2, b_2, eps=1e-6)
    out = jax.block_until_ready(out)

    ref = layer_norm_ref(x, a_2, b_2, eps=1e-6)
    assert out.shape == x.shape
    assert jnp.allclose(out, ref, atol=1e-5, rtol=1e-5), "mismatch vs reference"

    print("KERNEL_OK")
</pallas_src>

<mosaic_0001>
module attributes {stable_mosaic.version = 11 : i64} {
  func.func @_layernorm_kernel(%arg0: i32, %arg1: memref<8x32xf32, #tpu.memory_space<vmem>>, %arg2: memref<2x32xf32, #tpu.memory_space<vmem>>, %arg3: memref<8x32xf32, #tpu.memory_space<vmem>>) attributes {dimension_semantics = [#tpu.dimension_semantics<parallel>], iteration_bounds = array<i64: 2>, scalar_prefetch = 0 : i64, scratch_operands = 0 : i64, tpu.core_type = #tpu.core_type<tc>, window_params = [{transform_indices = @transform_0, window_bounds = array<i64: 8, 32>}, {pipeline_mode = #tpu.pipeline_mode<synchronous>, transform_indices = @transform_1, window_bounds = array<i64: 2, 32>}, {transform_indices = @transform_2, window_bounds = array<i64: 8, 32>}]} {
    %c0 = arith.constant 0 : index
    %c0_0 = arith.constant 0 : index
    %0 = vector.load %arg1[%c0, %c0_0] : memref<8x32xf32, #tpu.memory_space<vmem>>, vector<8x32xf32>
    %cst = arith.constant dense<0.000000e+00> : vector<8xf32>
    %1 = vector.multi_reduction <add>, %0, %cst [1] : vector<8x32xf32> to vector<8xf32>
    %2 = vector.shape_cast %1 : vector<8xf32> to vector<8x1xf32>
    %cst_1 = arith.constant 3.125000e-02 : f32
    %3 = vector.broadcast %cst_1 : f32 to vector<8x1xf32>
    %4 = arith.mulf %2, %3 : vector<8x1xf32>
    %5 = vector.broadcast %4 : vector<8x1xf32> to vector<8x32xf32>
    %6 = arith.subf %0, %5 : vector<8x32xf32>
    %7 = arith.mulf %6, %6 : vector<8x32xf32>
    %cst_2 = arith.constant dense<0.000000e+00> : vector<8xf32>
    %8 = vector.multi_reduction <add>, %7, %cst_2 [1] : vector<8x32xf32> to vector<8xf32>
    %9 = vector.shape_cast %8 : vector<8xf32> to vector<8x1xf32>
    %cst_3 = arith.constant 0.0322580636 : f32
    %10 = vector.broadcast %cst_3 : f32 to vector<8x1xf32>
    %11 = arith.mulf %9, %10 : vector<8x1xf32>
    %12 = math.sqrt %11 : vector<8x1xf32>
    %cst_4 = arith.constant 9.99999997E-7 : f32
    %13 = vector.broadcast %cst_4 : f32 to vector<8x1xf32>
    %14 = arith.addf %12, %13 : vector<8x1xf32>
    %15 = tpu.reciprocal %14 {approx = true} : vector<8x1xf32> -> vector<8x1xf32>
    %16 = arith.mulf %14, %15 : vector<8x1xf32>
    %cst_5 = arith.constant 2.000000e+00 : f32
    %17 = vector.broadcast %cst_5 : f32 to vector<8x1xf32>
    %18 = arith.subf %17, %16 : vector<8x1xf32>
    %19 = arith.mulf %15, %18 : vector<8x1xf32>
    %c0_6 = arith.constant 0 : index
    %c0_7 = arith.constant 0 : index
    %20 = vector.load %arg2[%c0_6, %c0_7] : memref<2x32xf32, #tpu.memory_space<vmem>>, vector<1x32xf32>
    %c1 = arith.constant 1 : index
    %c0_8 = arith.constant 0 : index
    %21 = vector.load %arg2[%c1, %c0_8] : memref<2x32xf32, #tpu.memory_space<vmem>>, vector<1x32xf32>
    %22 = vector.broadcast %19 : vector<8x1xf32> to vector<8x32xf32>
    %23 = arith.mulf %6, %22 : vector<8x32xf32>
    %24 = vector.broadcast %20 : vector<1x32xf32> to vector<8x32xf32>
    %25 = arith.mulf %24, %23 : vector<8x32xf32>
    %26 = vector.broadcast %21 : vector<1x32xf32> to vector<8x32xf32>
    %27 = arith.addf %25, %26 : vector<8x32xf32>
    %c0_9 = arith.constant 0 : index
    %c0_10 = arith.constant 0 : index
    %28 = vector.load %arg3[%c0_9, %c0_10] : memref<8x32xf32, #tpu.memory_space<vmem>>, vector<8x32xf32>
    tpu.vector_store %arg3[%c0_9, %c0_10], %27 {strides = array<i32>} : memref<8x32xf32, #tpu.memory_space<vmem>>, vector<8x32xf32>,
    return
  }
  func.func @transform_0(%arg0: i32) -> (i32, i32) {
    %c0_i32 = arith.constant 0 : i32
    %c0_i32_0 = arith.constant 0 : i32
    return %arg0, %c0_i32 : i32, i32
  }
  func.func @transform_1(%arg0: i32) -> (i32, i32) {
    %c0_i32 = arith.constant 0 : i32
    %c0_i32_0 = arith.constant 0 : i32
    %c0_i32_1 = arith.constant 0 : i32
    return %c0_i32, %c0_i32_0 : i32, i32
  }
  func.func @transform_2(%arg0: i32) -> (i32, i32) {
    %c0_i32 = arith.constant 0 : i32
    %c0_i32_0 = arith.constant 0 : i32
    return %arg0, %c0_i32 : i32, i32
  }
}

</mosaic_0001>

<llo_original>
// kernel: tpu_custom_call.1
$region0: #{tpu_custom_call.1}
  #allocation0 [shape = 'u32[]', space=smem, size = 0x4, offset = 0x4, fixed_abs, tag = 'smem constant byte address 0x4 - core index']
  #allocation1 [shape = 'u32[72,128]{1,0:T(1,128)}', space=vmem, size = 0x9000, scoped, tag = 'internal scratch']
  %s0 = inlined_call_operand.hbm [shape: f32[16,32], index: 0, kind: input, shape index: {}]
  %s1 = inlined_call_operand.hbm [shape: f32[2,32], index: 1, kind: input, shape index: {}]
  %s2 = inlined_call_operand.hbm [shape: f32[16,32], index: 2, kind: output, shape index: {}]
  %s3 = sld [smem:[#allocation0]]
  $region49: #{tpu_custom_call.1} parent=0
    _
  %s5 = ssub.s32 1, %s3
  %s6 = scalar_select 0, %s5, %s3
  $region1: #{tpu_custom_call.1} parent=0
    #allocation2 [shape = 'u8[8192]{0}', space=vmem, size = 0x2000, scoped, tag = 'input window, operand 0']
    #allocation3 [shape = 's32[2]{0}', space=sflag, size = 0x8, scoped, tag = 'scoped memory for tpu_custom_call.1']
    #allocation4 [shape = 's32[2]{0}', space=sflag, size = 0x8, scoped, tag = 'scoped memory for tpu_custom_call.1']
    #allocation5 [shape = 'u8[1024]{0}', space=vmem, size = 0x400, scoped, tag = 'input window, operand 1, single buffered']
    #allocation6 [shape = 's32[1]{0}', space=sflag, size = 0x4, scoped, tag = 'scoped memory for tpu_custom_call.1']
    #allocation7 [shape = 'u8[8192]{0}', space=vmem, size = 0x2000, scoped, tag = 'output window, operand 0']
    %7 = vsyncpa [#allocation3], 0
    %s8 = scalar_lea.sflag [#allocation3], 1
    %9 = vsyncpa %s8, 0
    %10 = vsyncpa [#allocation6], 0
    %11 = vsyncpa [#allocation4], 0
    %s12 = scalar_lea.sflag [#allocation4], 1
    %13 = vsyncpa %s12, 0
    loop: start=0, step=1, limit=4
    $region2: #{tpu_custom_call.1} parent=1 // loop_pre_header
      _
    $region3: #{tpu_custom_call.1} parent=1 // loop_header
      %s15 = sphi 0, %s19
      %p16 = scmp.ge.s32.totalorder %s15, 4
      %s25 = sphi 0, %s27
      %s28 = sphi 0, %s25
      %s29 = sphi 0, %s28
      %s45 = sphi 0, %s29
      %s49 = sphi 0, %s49
      %s51 = sphi 0, %s49
      %s52 = sphi 0, %s51
      %s66 = sphi 0, %s52
      %s72 = sphi 0, %s74
      %s75 = sphi 0, %s72
      %s76 = sphi 0, %s75
      %s92 = sphi 0, %s76
    $region4: #{tpu_custom_call.1} parent=1 // loop_header_branch
      %18 = sbr.rel (%p16) target = $region8
    $region5: #{tpu_custom_call.1} parent=1 // loop_body
      %s20 = ssub.s32 %s15, 1
      %s21 = ssub.s32 %s15, 2
      %s22 = sadd.s32 %s15, 1
      %s23 = ssub.s32 %s15, %s22
      %p24 = scmp.eq.s32.totalorder %s23, 0
      %s26 = sadd.s32 %s25, 1
      %s27 = scalar_select %p24, %s25, %s26
      %p30 = pneg %p24
      %p31 = scmp.eq.s32.totalorder %s15, 1
      %p32 = por %p30, %p31
      %p33 = scmp.ne.s32.totalorder %s25, %s28
      %p34 = scmp.eq.s32.totalorder %s15, 0
      %p35 = por %p33, %p34
      %p36 = scmp.ne.s32.totalorder %s25, %s28
      %p37 = scmp.eq.s32.totalorder %s20, 1
      %p38 = por %p36, %p37
      %p39 = scmp.ne.s32.totalorder %s28, %s29
      %p40 = scmp.eq.s32.totalorder %s20, 0
      %p41 = por %p39, %p40
      %p42 = scmp.ne.s32.totalorder %s28, %s29
      %p43 = scmp.eq.s32.totalorder %s21, 1
      %p44 = por %p42, %p43
      %p46 = scmp.ne.s32.totalorder %s29, %s45
      %p47 = scmp.eq.s32.totalorder %s21, 0
      %p48 = por %p46, %p47
      %s50 = sadd.s32 %s49, 1
      %p53 = scmp.eq.s32.totalorder %s15, 1
      %p54 = scmp.ne.s32.totalorder %s49, %s51
      %p55 = scmp.eq.s32.totalorder %s15, 0
      %p56 = por %p54, %p55
      %p57 = scmp.ne.s32.totalorder %s49, %s51
      %p58 = scmp.eq.s32.totalorder %s20, 1
      %p59 = por %p57, %p58
      %p60 = scmp.ne.s32.totalorder %s51, %s52
      %p61 = scmp.eq.s32.totalorder %s20, 0
      %p62 = por %p60, %p61
      %p63 = scmp.ne.s32.totalorder %s51, %s52
      %p64 = scmp.eq.s32.totalorder %s21, 1
      %p65 = por %p63, %p64
      %p67 = scmp.ne.s32.totalorder %s52, %s66
      %p68 = scmp.eq.s32.totalorder %s21, 0
      %p69 = por %p67, %p68
      %s70 = ssub.s32 %s15, %s22
      %p71 = scmp.eq.s32.totalorder %s70, 0
      %s73 = sadd.s32 %s72, 1
      %s74 = scalar_select %p71, %s72, %s73
      %p77 = pneg %p71
      %p78 = scmp.eq.s32.totalorder %s15, 1
      %p79 = por %p77, %p78
      %p80 = scmp.ne.s32.totalorder %s72, %s75
      %p81 = scmp.eq.s32.totalorder %s15, 0
      %p82 = por %p80, %p81
      %p83 = scmp.ne.s32.totalorder %s72, %s75
      %p84 = scmp.eq.s32.totalorder %s20, 1
      %p85 = por %p83, %p84
      %p86 = scmp.ne.s32.totalorder %s75, %s76
      %p87 = scmp.eq.s32.totalorder %s20, 0
      %p88 = por %p86, %p87
      %p89 = scmp.ne.s32.totalorder %s75, %s76
      %p90 = scmp.eq.s32.totalorder %s21, 1
      %p91 = por %p89, %p90
      %p93 = scmp.ne.s32.totalorder %s76, %s92
      %p94 = scmp.eq.s32.totalorder %s21, 0
      %p95 = por %p93, %p94
      %p96 = scmp.le.s32.totalorder 1, %s15
      %p97 = scmp.lt.s32.totalorder %s15, 3
      %p98 = pnand %p96, %p97
      %p99 = pneg %p98
      // Predicated region
      $region9: #{tpu_custom_call.1} parent=5 // pred_check
        _
      $region10: #{tpu_custom_call.1} parent=5 // pred_check_branch
        %101 = sbr.rel (%p98) target = $region12
      $region11: #{tpu_custom_call.1} parent=5 // pred_region
        %s102 = ssub.s32 %s15, 1
        // Predicated region
        $region13: #{tpu_custom_call.1} parent=11 // pred_check
          %p103 = pneg %p62
        $region14: #{tpu_custom_call.1} parent=11 // pred_check_branch
          %105 = sbr.rel (%p103) target = $region16
        $region15: #{tpu_custom_call.1} parent=11 // pred_region
          %107 = vsyncadd [#allocation6], 0
          %s109 = sshll.u32 %s1, 4
          %s110 = int_to_ptr.hbm [resolvable:$true] %s109
          %s111 = sshll.u32 [#allocation5], 4
          %s112 = int_to_ptr.vmem [resolvable:$true] %s111
          %114 = dma.hbm_to_vmem [thread:$0]  %s110, 32, %s112, [#allocation6]
        $region16: #{tpu_custom_call.1} parent=11 // pred_fallthru
          _
      $region12: #{tpu_custom_call.1} parent=5 // pred_fallthru
        _
      %p115 = scmp.lt.s32.totalorder %s15, 2
      // Predicated region
      $region17: #{tpu_custom_call.1} parent=5 // pred_check
        %p116 = pneg %p115
      $region18: #{tpu_custom_call.1} parent=5 // pred_check_branch
        %118 = sbr.rel (%p116) target = $region20
      $region19: #{tpu_custom_call.1} parent=5 // pred_region
        // Predicated region
        $region21: #{tpu_custom_call.1} parent=19 // pred_check
          %p119 = pneg %p35
        $region22: #{tpu_custom_call.1} parent=19 // pred_check_branch
          %121 = sbr.rel (%p119) target = $region24
        $region23: #{tpu_custom_call.1} parent=19 // pred_region
          %s122 = sand.u32 %s25, 1
          %s123 = scalar_lea.sflag [#allocation3], %s122
          %s124 = sand.u32 %s25, 1
          %s125 = smul.addr %s124, 8
          %s126 = scalar_lea.vmem [#allocation2], %s125
          %128 = vsyncadd %s123, 0
          %s129 = smul.addr %s15, 8
          %s130 = scalar_lea.hbm %s0, %s129
          %s132 = sshll.u32 %s130, 4
          %s133 = int_to_ptr.hbm [resolvable:$true] %s132
          %s134 = sshll.u32 %s126, 4
          %s135 = int_to_ptr.vmem [resolvable:$true] %s134
          %137 = dma.hbm_to_vmem [thread:$0]  %s133, 128, %s135, %s123
        $region24: #{tpu_custom_call.1} parent=19 // pred_fallthru
          _
      $region20: #{tpu_custom_call.1} parent=5 // pred_fallthru
        _
      %p138 = scmp.le.s32.totalorder 1, %s15
      %p139 = scmp.lt.s32.totalorder %s15, 3
      %p140 = pnand %p138, %p139
      %p141 = pneg %p140
      // Predicated region
      $region25: #{tpu_custom_call.1} parent=5 // pred_check
        _
      $region26: #{tpu_custom_call.1} parent=5 // pred_check_branch
        %143 = sbr.rel (%p140) target = $region28
      $region27: #{tpu_custom_call.1} parent=5 // pred_region
        %s144 = ssub.s32 %s15, 1
        %s145 = sand.u32 %s28, 1
        %s146 = scalar_lea.sflag [#allocation3], %s145
        %s147 = sand.u32 %s28, 1
        %s148 = smul.addr %s147, 8
        %s149 = scalar_lea.vmem [#allocation2], %s148
        // Predicated region
        $region29: #{tpu_custom_call.1} parent=27 // pred_check
          %p150 = pneg %p41
        $region30: #{tpu_custom_call.1} parent=27 // pred_check_branch
          %152 = sbr.rel (%p150) target = $region32
        $region31: #{tpu_custom_call.1} parent=27 // pred_region
          %154 = dma.done %s146, 128
        $region32: #{tpu_custom_call.1} parent=27 // pred_fallthru
          _
        // Predicated region
        $region33: #{tpu_custom_call.1} parent=27 // pred_check
          %p155 = pneg %p62
        $region34: #{tpu_custom_call.1} parent=27 // pred_check_branch
          %157 = sbr.rel (%p155) target = $region36
        $region35: #{tpu_custom_call.1} parent=27 // pred_region
          %159 = dma.done [#allocation6], 32
        $region36: #{tpu_custom_call.1} parent=27 // pred_fallthru
          _
        %s160 = sand.u32 %s28, 1
        %s161 = scalar_lea.sflag [#allocation3], %s160
        %s162 = sand.u32 %s28, 1
        %s163 = smul.addr %s162, 8
        %s164 = scalar_lea.vmem [#allocation2], %s163
        %p165 = pneg %p41
        %p166 = pneg %p38
        %p167 = pneg %p62
        %p168 = pneg %p59
        %p169 = pneg %p88
        %p170 = pneg %p85
        %s171 = sand.u32 %s75, 1
        %s172 = scalar_lea.sflag [#allocation4], %s171
        %s173 = sand.u32 %s75, 1
        %s174 = smul.addr %s173, 8
        %s175 = scalar_lea.vmem [#allocation7], %s174
        %v176 = vld [vmem:[%s149] sm:$0xff]
        %vm177 = vcmask 261120
        %v178 = vsel %vm177, %v176, 0.0
        %179 = vadd.xlane.f32.xlu0 %v178
        %v180 = vpop.xlane.xlu0 %179
        %v181 = vmul.f32 %v180, 0.03125
        %v182 = vsub.f32 %v176, %v181
        %v183 = vmul.f32 %v182, %v182
        %v184 = vsel %vm177, %v183, 0.0
        %185 = vadd.xlane.f32.xlu0 %v184
        %v186 = vpop.xlane.xlu0 %185
        %v187 = vmul.f32 %v186, 0.032258064
        %v188 = vrsqrt.pop %v187
        %v189 = vmul.f32 %v188, %v187
        %v190 = vmul.f32 %v189, %v188
        %v191 = vmul.f32 0.5, %v190
        %v192 = vsub.f32 1.5, %v191
        %v193 = vmul.f32 %v188, %v192
        %v194 = vmul.f32 %v187, %v193
        %vm195 = vcmp.eq.f32.partialorder %v187, inf
        %v196 = vsel %vm195, %v187, %v194
        %vm197 = vcmp.eq.f32.partialorder %v187, 0.0
        %v198 = vand.u32 %v187, 2147483648
        %v199 = vsel %vm197, %v198, %v196
        %v200 = vadd.f32 %v199, 1e-06
        %v201 = vrcp.pop %v200
        %v202 = vmul.f32 %v200, %v201
        %v203 = vsub.f32 2.0, %v202
        %v204 = vmul.f32 %v201, %v203
        %v205 = vld [vmem:[#allocation5] sm:$0x1]
        %v206 = vld [vmem:[#allocation5 + $0x1] sm:$0x1]
        %v207 = vmul.f32 %v182, %v204
        %v208 = vperm.slane %v205, 0
        %v209 = vmul.f32 %v208, %v207
        %v210 = vperm.slane %v206, 0
        %v211 = vadd.f32 %v209, %v210
        %212 = vst.msk [vmem:[%s175] sm:$0xff] %vm177, %v211
        %s213 = sand.u32 %s75, 1
        %s214 = scalar_lea.sflag [#allocation4], %s213
        %s215 = sand.u32 %s75, 1
        %s216 = smul.addr %s215, 8
        %s217 = scalar_lea.vmem [#allocation7], %s216
        // Predicated region
        $region37: #{tpu_custom_call.1} parent=27 // pred_check
          %p218 = pneg %p85
        $region38: #{tpu_custom_call.1} parent=27 // pred_check_branch
          %220 = sbr.rel (%p218) target = $region40
        $region39: #{tpu_custom_call.1} parent=27 // pred_region
          %222 = vsyncadd %s214, 0
          %s223 = smul.addr %s20, 8
          %s224 = scalar_lea.hbm %s2, %s223
          %s226 = sshll.u32 %s217, 4
          %s227 = int_to_ptr.vmem [resolvable:$true] %s226
          %s228 = sshll.u32 %s224, 4
          %s229 = int_to_ptr.hbm [resolvable:$true] %s228
          %231 = dma.vmem_to_hbm [thread:$0]  %s227, 128, %s229, %s214
        $region40: #{tpu_custom_call.1} parent=27 // pred_fallthru
          _
      $region28: #{tpu_custom_call.1} parent=5 // pred_fallthru
        _
      %p232 = scmp.le.s32.totalorder 2, %s15
      // Predicated region
      $region41: #{tpu_custom_call.1} parent=5 // pred_check
        %p233 = pneg %p232
      $region42: #{tpu_custom_call.1} parent=5 // pred_check_branch
        %235 = sbr.rel (%p233) target = $region44
      $region43: #{tpu_custom_call.1} parent=5 // pred_region
        %s236 = ssub.s32 %s15, 2
        // Predicated region
        $region45: #{tpu_custom_call.1} parent=43 // pred_check
          %p237 = pneg %p91
        $region46: #{tpu_custom_call.1} parent=43 // pred_check_branch
          %239 = sbr.rel (%p237) target = $region48
        $region47: #{tpu_custom_call.1} parent=43 // pred_region
          %s240 = sand.u32 %s76, 1
          %s241 = scalar_lea.sflag [#allocation4], %s240
          %s242 = sand.u32 %s76, 1
          %s243 = smul.addr %s242, 8
          %s244 = scalar_lea.vmem [#allocation7], %s243
          %246 = dma.done %s241, 128
        $region48: #{tpu_custom_call.1} parent=43 // pred_fallthru
          _
      $region44: #{tpu_custom_call.1} parent=5 // pred_fallthru
        _
    $region6: #{tpu_custom_call.1} parent=1 // loop_footer
      %s19 = sadd.s32 1, %s15
    $region7: #{tpu_custom_call.1} parent=1 // loop_footer_branch
      %14 = sbr.rel target = $region3
    $region8: #{tpu_custom_call.1} parent=1 // loop_exit
      _
    %247 = vsyncpa [#allocation3], 1
    %s248 = scalar_lea.sflag [#allocation3], 1
    %249 = vsyncpa %s248, 1
    %250 = vsyncpa [#allocation6], 1
    %251 = vsyncpa [#allocation4], 1
    %s252 = scalar_lea.sflag [#allocation4], 1
    %253 = vsyncpa %s252, 1

</llo_original>
